<compile_context>
chip_gen: v6e
topology: v6e:2x2x1
jax: 0.10.0
libtpu: 0.0.40
codegen_flags: <defaults>
</compile_context>

<pallas_src>
import jax
import jax.numpy as jnp
from jax.experimental import pallas as pl
from jax.experimental.pallas import tpu as pltpu


def _round_up(a: int, m: int) -> int:
    return (a + m - 1) // m * m


def make_actor_critic_kernel(num_feature_layers: int, action_dim: int):
    """Kernel factory (num_feature_layers / action_dim are static)."""

    def kernel(*refs):
        # refs = x, (wf_i, bf_i) * num_feature_layers, wh1, bh1, wh2, bh2, out
        x_ref = refs[0]
        idx = 1
        feat_refs = []
        for _ in range(num_feature_layers):
            feat_refs.append((refs[idx], refs[idx + 1]))
            idx += 2
        wh1_ref, bh1_ref, wh2_ref, bh2_ref = refs[idx:idx + 4]
        out_ref = refs[idx + 4]

        mm_dtype = wh1_ref.dtype  # matmul operand dtype (f32 or bf16)

        # Feature network: [Linear -> tanh] * (len(hidden_layers) - 1)
        h = x_ref[...]
        for w_ref, b_ref in feat_refs:
            h = jnp.tanh(
                jnp.dot(h.astype(mm_dtype), w_ref[...],
                        preferred_element_type=jnp.float32) + b_ref[...]
            )

        # Fused actor/critic layer 1: one matmul, one bias add, one tanh.
        h = jnp.tanh(
            jnp.dot(h.astype(mm_dtype), wh1_ref[...],
                    preferred_element_type=jnp.float32) + bh1_ref[...]
        )

        # Fused (block-diagonal, lane-padded) layer 2:
        #   z lanes [0, action_dim)  -> actor logits
        #   z lane  action_dim       -> critic state value
        #   z lanes beyond           -> exact zeros (wh2/bh2 pad columns are
        #                               exactly zero; invariant relied on by
        #                               the jnp.where store below)
        z = jnp.dot(h.astype(mm_dtype), wh2_ref[...],
                    preferred_element_type=jnp.float32) + bh2_ref[...]

        lane = jax.lax.broadcasted_iota(jnp.int32, z.shape, dimension=1)
        is_logit = lane < action_dim

        # Softmax over the real action lanes only (pad lanes masked to -inf).
        masked = jnp.where(is_logit, z, -jnp.inf)
        m = jnp.max(masked, axis=-1, keepdims=True)
        e = jnp.exp(masked - m)                      # padded lanes -> exp(-inf) = 0
        d = jnp.sum(e, axis=-1, keepdims=True)
        inv = pl.reciprocal(d, approx=True)          # EUP slot (nearly free)
        inv = inv * (2.0 - d * inv)                  # one Newton step -> full f32 accuracy
        probs = e * inv

        # Narrow combined store: probs | value | zeros.
        out_ref[...] = jnp.where(is_logit, probs, z).astype(out_ref.dtype)

    return kernel


def actor_critic_forward(x, params, *, compute_dtype=jnp.float32, batch_tile=2048):
    """Runs the whole ActorCritic forward in one pallas_call.

    Returns (action_probs (B, action_dim), state_value (B, 1)), both float32.
    compute_dtype=jnp.bfloat16 feeds bf16 to the MXU on v5e/v6e/v7x
    (f32 accumulation, f32 bias/tanh/softmax kept).
    """
    B, state_dim = x.shape
    action_dim = params["wa2"].shape[1]
    h_head = params["wa1"].shape[1]

    # Narrow lane-packed output: probs lanes + value lane, rounded to 8.
    out_pad = _round_up(action_dim + 1, 8)

    # ---- wrapper-side weight packing (fused heads, zero-padded layer 2) ----
    feature = params["feature"]  # list of (W, b)
    wh1 = jnp.concatenate([params["wa1"], params["wc1"]], axis=1)      # (prev, 2H)
    bh1 = jnp.concatenate([params["ba1"], params["bc1"]], axis=1)      # (1, 2H)

    wh2 = jnp.zeros((2 * h_head, out_pad), jnp.float32)
    wh2 = wh2.at[:h_head, :action_dim].set(params["wa2"])
    wh2 = wh2.at[h_head:, action_dim].set(params["wc2"][:, 0])
    bh2 = jnp.zeros((1, out_pad), jnp.float32)
    bh2 = bh2.at[0, :action_dim].set(params["ba2"][0])
    bh2 = bh2.at[0, action_dim].set(params["bc2"][0, 0])
    # NOTE: pad columns of wh2/bh2 MUST stay exactly zero (zeros survive the
    # bf16 cast) so pad lanes store 0 and the value lane survives the
    # jnp.where in the kernel.

    # Matmul operands in compute_dtype; biases stay f32 (added post-accumulate).
    cast = lambda a: a.astype(compute_dtype)
    x_c = cast(x)
    feat_ops = []
    for (w, b) in feature:
        feat_ops += [cast(w), b.astype(jnp.float32)]
    wh1_c, wh2_c = cast(wh1), cast(wh2)

    # ---- batch tiling / padding ----
    # bf16 operands want a (16, 128) min tile -> round tile_b to 16 in bf16 mode.
    is_bf16 = jnp.dtype(compute_dtype) == jnp.dtype(jnp.bfloat16)
    min_tile = 16 if is_bf16 else 8

    tile_b = _round_up(max(batch_tile, min_tile), min_tile)
    tile_b = min(tile_b, 4096)                         # VMEM headroom on v5e/v7x
    b_min = _round_up(max(B, 1), min_tile)
    tile_b = min(tile_b, b_min)                        # don't overpad tiny batches
    # v7x: keep >= 2 grid steps (even count) when the batch allows it so the
    # second TensorCore isn't idle; harmless on single-TC v5e/v6e.
    if b_min >= 2 * min_tile:
        tile_b = min(tile_b, _round_up(pl.cdiv(B, 2), min_tile))
    b_pad = _round_up(B, tile_b)
    if b_pad != B:
        x_c = jnp.pad(x_c, ((0, b_pad - B), (0, 0)))
    grid = (b_pad // tile_b,)

    def resident(a):
        # Full-array block, resident across the batch grid. Its block index
        # never changes, so a single pipeline buffer suffices.
        try:
            return pl.BlockSpec(a.shape, lambda i: (0, 0),
                                pipeline_mode=pl.Buffered(1))
        except Exception:  # older jax without pipeline_mode kwarg
            return pl.BlockSpec(a.shape, lambda i: (0, 0))

    operands = [x_c] + feat_ops + [wh1_c, bh1, wh2_c, bh2]
    in_specs = [pl.BlockSpec((tile_b, state_dim), lambda i: (i, 0))]
    in_specs += [resident(a) for a in operands[1:]]

    out_shape = jax.ShapeDtypeStruct((b_pad, out_pad), jnp.float32)
    out_spec = pl.BlockSpec((tile_b, out_pad), lambda i: (i, 0))

    kernel = make_actor_critic_kernel(len(feature), action_dim)

    # VMEM per step (tile_b=2048, f32): x tile ~1 MiB (lane-padded) + out tile
    # ~1 MiB + small activations, double-buffered -> well under the 16 MiB
    # default scoped VMEM on v5e, so no vmem_limit_bytes override is needed.
    combined = pl.pallas_call(
        kernel,
        out_shape=out_shape,
        grid=grid,
        in_specs=in_specs,
        out_specs=out_spec,
        compiler_params=pltpu.CompilerParams(
            dimension_semantics=("parallel",),  # megacore / v7x: split batch tiles
        ),
    )(*operands)

    probs = combined[:B, :action_dim]
    value = combined[:B, action_dim:action_dim + 1]
    return probs, value


def init_params(key, state_dim, action_dim, hidden_layers):
    """PyTorch-nn.Linear-style init (U(-1/sqrt(fan_in), +1/sqrt(fan_in)))."""

    def linear(k, fan_in, fan_out):
        kw, kb = jax.random.split(k)
        bound = 1.0 / jnp.sqrt(jnp.float32(fan_in))
        w = jax.random.uniform(kw, (fan_in, fan_out), jnp.float32, -bound, bound)
        b = jax.random.uniform(kb, (1, fan_out), jnp.float32, -bound, bound)
        return w, b

    n_feat = len(hidden_layers) - 1
    keys = jax.random.split(key, n_feat + 4)

    feature = []
    prev = state_dim
    for li, dim in enumerate(hidden_layers[:-1]):
        feature.append(linear(keys[li], prev, dim))
        prev = dim
    h_head = hidden_layers[-1]

    wa1, ba1 = linear(keys[n_feat + 0], prev, h_head)
    wa2, ba2 = linear(keys[n_feat + 1], h_head, action_dim)
    wc1, bc1 = linear(keys[n_feat + 2], prev, h_head)
    wc2, bc2 = linear(keys[n_feat + 3], h_head, 1)
    return dict(feature=feature, wa1=wa1, ba1=ba1, wa2=wa2, ba2=ba2,
                wc1=wc1, bc1=bc1, wc2=wc2, bc2=bc2)


def reference_forward(x, p):
    h = x
    for (w, b) in p["feature"]:
        h = jnp.tanh(h @ w + b)
    ha = jnp.tanh(h @ p["wa1"] + p["ba1"])
    probs = jax.nn.softmax(ha @ p["wa2"] + p["ba2"], axis=-1)
    hc = jnp.tanh(h @ p["wc1"] + p["bc1"])
    value = hc @ p["wc2"] + p["bc2"]
    return probs, value


if __name__ == "__main__":
    state_dim = 8
    action_dim = 4
    hidden_layers = [32, 32]   # [:-1] -> feature net widths, [-1] -> head width

    key = jax.random.PRNGKey(0)
    kx, kp, kx2 = jax.random.split(key, 3)
    params = init_params(kp, state_dim, action_dim, hidden_layers)

    # Small sanity run (single batch tile).
    batch = 8
    x = jax.random.normal(kx, (batch, state_dim), jnp.float32)
    probs, value = actor_critic_forward(x, params)
    jax.block_until_ready((probs, value))

    ref_probs, ref_value = reference_forward(x, params)
    assert probs.shape == (batch, action_dim)
    assert value.shape == (batch, 1)
    assert jnp.allclose(probs, ref_probs, atol=1e-5, rtol=1e-5)
    assert jnp.allclose(value, ref_value, atol=1e-5, rtol=1e-5)
    assert jnp.allclose(jnp.sum(probs, axis=-1), 1.0, atol=1e-5)

    # Second run exercising the tiled/padded batched path (grid >= 2 steps,
    # so v7x's two TensorCores both get work).
    batch2 = 300
    x2 = jax.random.normal(kx2, (batch2, state_dim), jnp.float32)
    probs2, value2 = actor_critic_forward(x2, params, batch_tile=2048)
    jax.block_until_ready((probs2, value2))
    ref_probs2, ref_value2 = reference_forward(x2, params)
    assert probs2.shape == (batch2, action_dim)
    assert value2.shape == (batch2, 1)
    assert jnp.allclose(probs2, ref_probs2, atol=1e-5, rtol=1e-5)
    assert jnp.allclose(value2, ref_value2, atol=1e-5, rtol=1e-5)

    # TODO(synk): for production rollouts call with compute_dtype=jnp.bfloat16
    # (halves x DMA bytes / VMEM tile; loosen tolerance vs. the f32 reference).
    # TODO(synk): if profiling at large tile_b shows the 32-byte-per-row x DMA
    # exposed, pre-fold 16 state rows per 128-lane row in the wrapper and
    # unpack once in-kernel before the first matmul (measure first).

    print("KERNEL_OK")
</pallas_src>

<mosaic_0001>
module attributes {stable_mosaic.version = 11 : i64} {
  func.func @kernel(%arg0: i32, %arg1: memref<8x8xf32, #tpu.memory_space<vmem>>, %arg2: memref<8x32xf32, #tpu.memory_space<vmem>>, %arg3: memref<1x32xf32, #tpu.memory_space<vmem>>, %arg4: memref<32x64xf32, #tpu.memory_space<vmem>>, %arg5: memref<1x64xf32, #tpu.memory_space<vmem>>, %arg6: memref<64x8xf32, #tpu.memory_space<vmem>>, %arg7: memref<1x8xf32, #tpu.memory_space<vmem>>, %arg8: memref<8x8xf32, #tpu.memory_space<vmem>>) attributes {dimension_semantics = [#tpu.dimension_semantics<parallel>], iteration_bounds = array<i64: 1>, scalar_prefetch = 0 : i64, scratch_operands = 0 : i64, tpu.core_type = #tpu.core_type<tc>, window_params = [{transform_indices = @transform_0, window_bounds = array<i64: 8, 8>}, {pipeline_mode = #tpu.pipeline_mode<synchronous>, transform_indices = @transform_1, window_bounds = array<i64: 8, 32>}, {pipeline_mode = #tpu.pipeline_mode<synchronous>, transform_indices = @transform_2, window_bounds = array<i64: 1, 32>}, {pipeline_mode = #tpu.pipeline_mode<synchronous>, transform_indices = @transform_3, window_bounds = array<i64: 32, 64>}, {pipeline_mode = #tpu.pipeline_mode<synchronous>, transform_indices = @transform_4, window_bounds = array<i64: 1, 64>}, {pipeline_mode = #tpu.pipeline_mode<synchronous>, transform_indices = @transform_5, window_bounds = array<i64: 64, 8>}, {pipeline_mode = #tpu.pipeline_mode<synchronous>, transform_indices = @transform_6, window_bounds = array<i64: 1, 8>}, {transform_indices = @transform_7, window_bounds = array<i64: 8, 8>}]} {
    %c0 = arith.constant 0 : index
    %c0_0 = arith.constant 0 : index
    %0 = vector.load %arg1[%c0, %c0_0] : memref<8x8xf32, #tpu.memory_space<vmem>>, vector<8x8xf32>
    %c0_1 = arith.constant 0 : index
    %c0_2 = arith.constant 0 : index
    %1 = vector.load %arg2[%c0_1, %c0_2] : memref<8x32xf32, #tpu.memory_space<vmem>>, vector<8x32xf32>
    %cst = arith.constant dense<0.000000e+00> : vector<8x32xf32>
    %2 = tpu.matmul %0, %1, %cst {dimension_numbers = #tpu.dot_dimension_numbers<[1], [0], [0], [1], [0, 0, 1, 1], [], []>} : vector<8x8xf32>, vector<8x32xf32>, vector<8x32xf32> -> vector<8x32xf32>
    %c0_3 = arith.constant 0 : index
    %c0_4 = arith.constant 0 : index
    %3 = vector.load %arg3[%c0_3, %c0_4] : memref<1x32xf32, #tpu.memory_space<vmem>>, vector<1x32xf32>
    %4 = vector.broadcast %3 : vector<1x32xf32> to vector<8x32xf32>
    %5 = arith.addf %2, %4 : vector<8x32xf32>
    %6 = math.tanh %5 : vector<8x32xf32>
    %c0_5 = arith.constant 0 : index
    %c0_6 = arith.constant 0 : index
    %7 = vector.load %arg4[%c0_5, %c0_6] : memref<32x64xf32, #tpu.memory_space<vmem>>, vector<32x64xf32>
    %cst_7 = arith.constant dense<0.000000e+00> : vector<8x64xf32>
    %8 = tpu.matmul %6, %7, %cst_7 {dimension_numbers = #tpu.dot_dimension_numbers<[1], [0], [0], [1], [0, 0, 1, 1], [], []>} : vector<8x32xf32>, vector<32x64xf32>, vector<8x64xf32> -> vector<8x64xf32>
    %c0_8 = arith.constant 0 : index
    %c0_9 = arith.constant 0 : index
    %9 = vector.load %arg5[%c0_8, %c0_9] : memref<1x64xf32, #tpu.memory_space<vmem>>, vector<1x64xf32>
    %10 = vector.broadcast %9 : vector<1x64xf32> to vector<8x64xf32>
    %11 = arith.addf %8, %10 : vector<8x64xf32>
    %12 = math.tanh %11 : vector<8x64xf32>
    %c0_10 = arith.constant 0 : index
    %c0_11 = arith.constant 0 : index
    %13 = vector.load %arg6[%c0_10, %c0_11] : memref<64x8xf32, #tpu.memory_space<vmem>>, vector<64x8xf32>
    %cst_12 = arith.constant dense<0.000000e+00> : vector<8x8xf32>
    %14 = tpu.matmul %12, %13, %cst_12 {dimension_numbers = #tpu.dot_dimension_numbers<[1], [0], [0], [1], [0, 0, 1, 1], [], []>} : vector<8x64xf32>, vector<64x8xf32>, vector<8x8xf32> -> vector<8x8xf32>
    %c0_13 = arith.constant 0 : index
    %c0_14 = arith.constant 0 : index
    %15 = vector.load %arg7[%c0_13, %c0_14] : memref<1x8xf32, #tpu.memory_space<vmem>>, vector<1x8xf32>
    %16 = vector.broadcast %15 : vector<1x8xf32> to vector<8x8xf32>
    %17 = arith.addf %14, %16 : vector<8x8xf32>
    %18 = tpu.iota {dimensions = array<i32: 1>} : vector<8x8xi32>
    %c4_i32 = arith.constant 4 : i32
    %19 = vector.broadcast %c4_i32 : i32 to vector<8x8xi32>
    %20 = arith.cmpi slt, %18, %19 : vector<8x8xi32>
    %cst_15 = arith.constant 0xFF800000 : f32
    %21 = vector.broadcast %cst_15 : f32 to vector<8x8xf32>
    %22 = arith.select %20, %17, %21 : vector<8x8xi1>, vector<8x8xf32>
    %cst_16 = arith.constant dense<0xFF800000> : vector<8xf32>
    %23 = vector.multi_reduction <maximumf>, %22, %cst_16 [1] : vector<8x8xf32> to vector<8xf32>
    %24 = vector.shape_cast %23 : vector<8xf32> to vector<8x1xf32>
    %25 = vector.broadcast %24 : vector<8x1xf32> to vector<8x8xf32>
    %26 = arith.subf %22, %25 : vector<8x8xf32>
    %27 = math.exp %26 : vector<8x8xf32>
    %cst_17 = arith.constant dense<0.000000e+00> : vector<8xf32>
    %28 = vector.multi_reduction <add>, %27, %cst_17 [1] : vector<8x8xf32> to vector<8xf32>
    %29 = vector.shape_cast %28 : vector<8xf32> to vector<8x1xf32>
    %30 = tpu.reciprocal %29 {approx = true} : vector<8x1xf32> -> vector<8x1xf32>
    %31 = arith.mulf %29, %30 : vector<8x1xf32>
    %cst_18 = arith.constant 2.000000e+00 : f32
    %32 = vector.broadcast %cst_18 : f32 to vector<8x1xf32>
    %33 = arith.subf %32, %31 : vector<8x1xf32>
    %34 = arith.mulf %30, %33 : vector<8x1xf32>
    %35 = vector.broadcast %34 : vector<8x1xf32> to vector<8x8xf32>
    %36 = arith.mulf %27, %35 : vector<8x8xf32>
    %37 = arith.select %20, %36, %17 : vector<8x8xi1>, vector<8x8xf32>
    %c0_19 = arith.constant 0 : index
    %c0_20 = arith.constant 0 : index
    %38 = vector.load %arg8[%c0_19, %c0_20] : memref<8x8xf32, #tpu.memory_space<vmem>>, vector<8x8xf32>
    tpu.vector_store %arg8[%c0_19, %c0_20], %37 {strides = array<i32>} : memref<8x8xf32, #tpu.memory_space<vmem>>, vector<8x8xf32>,
    return
  }
  func.func @transform_0(%arg0: i32) -> (i32, i32) {
    %c0_i32 = arith.constant 0 : i32
    %c0_i32_0 = arith.constant 0 : i32
    return %arg0, %c0_i32 : i32, i32
  }
  func.func @transform_1(%arg0: i32) -> (i32, i32) {
    %c0_i32 = arith.constant 0 : i32
    %c0_i32_0 = arith.constant 0 : i32
    %c0_i32_1 = arith.constant 0 : i32
    return %c0_i32, %c0_i32_0 : i32, i32
  }
  func.func @transform_2(%arg0: i32) -> (i32, i32) {
    %c0_i32 = arith.constant 0 : i32
    %c0_i32_0 = arith.constant 0 : i32
    %c0_i32_1 = arith.constant 0 : i32
    return %c0_i32, %c0_i32_0 : i32, i32
  }
  func.func @transform_3(%arg0: i32) -> (i32, i32) {
    %c0_i32 = arith.constant 0 : i32
    %c0_i32_0 = arith.constant 0 : i32
    %c0_i32_1 = arith.constant 0 : i32
    return %c0_i32, %c0_i32_0 : i32, i32
  }
  func.func @transform_4(%arg0: i32) -> (i32, i32) {
    %c0_i32 = arith.constant 0 : i32
    %c0_i32_0 = arith.constant 0 : i32
    %c0_i32_1 = arith.constant 0 : i32
    return %c0_i32, %c0_i32_0 : i32, i32
  }
  func.func @transform_5(%arg0: i32) -> (i32, i32) {
    %c0_i32 = arith.constant 0 : i32
    %c0_i32_0 = arith.constant 0 : i32
    %c0_i32_1 = arith.constant 0 : i32
    return %c0_i32, %c0_i32_0 : i32, i32
  }
  func.func @transform_6(%arg0: i32) -> (i32, i32) {
    %c0_i32 = arith.constant 0 : i32
    %c0_i32_0 = arith.constant 0 : i32
    %c0_i32_1 = arith.constant 0 : i32
    return %c0_i32, %c0_i32_0 : i32, i32
  }
  func.func @transform_7(%arg0: i32) -> (i32, i32) {
    %c0_i32 = arith.constant 0 : i32
    %c0_i32_0 = arith.constant 0 : i32
    return %arg0, %c0_i32 : i32, i32
  }
}

</mosaic_0001>

<llo_original>
// kernel: tpu_custom_call.1
$region0: #{tpu_custom_call.1}
  #allocation0 [shape = 'u32[]', space=smem, size = 0x4, offset = 0x4, fixed_abs, tag = 'smem constant byte address 0x4 - core index']
  #allocation1 [shape = 'u32[144,128]{1,0:T(1,128)}', space=vmem, size = 0x12000, scoped, tag = 'internal scratch']
  %s0 = inlined_call_operand.vmem [shape: f32[8,8], index: 0, kind: input, shape index: {}]
  %s1 = inlined_call_operand.vmem [shape: f32[8,32], index: 1, kind: input, shape index: {}]
  %s2 = inlined_call_operand.vmem [shape: f32[1,32], index: 2, kind: input, shape index: {}]
  %s3 = inlined_call_operand.vmem [shape: f32[32,64], index: 3, kind: input, shape index: {}]
  %s4 = inlined_call_operand.vmem [shape: f32[1,64], index: 4, kind: input, shape index: {}]
  %s5 = inlined_call_operand.vmem [shape: f32[64,8], index: 5, kind: input, shape index: {}]
  %s6 = inlined_call_operand.vmem [shape: f32[1,8], index: 6, kind: input, shape index: {}]
  %s7 = inlined_call_operand.hbm [shape: f32[8,8], index: 7, kind: output, shape index: {}]
  %s8 = sld [smem:[#allocation0]]
  $region38: #{tpu_custom_call.1} parent=0
    _
  %s10 = ssub.s32 1, %s8
  %s11 = scalar_select 0, %s10, %s8
  $region1: #{tpu_custom_call.1} parent=0
    #allocation2 [shape = 'u8[4096]{0}', space=vmem, size = 0x1000, scoped, tag = 'output window, operand 0, single buffered']
    #allocation3 [shape = 's32[1]{0}', space=sflag, size = 0x4, scoped, tag = 'scoped memory for tpu_custom_call.1']
    %12 = vsyncpa [#allocation3], 0
    // Predicated region
    $region2: #{tpu_custom_call.1} parent=1 // pred_check
      _
    $region3: #{tpu_custom_call.1} parent=1 // pred_check_branch
      %14 = sbr.rel (0) target = $region5
    $region4: #{tpu_custom_call.1} parent=1 // pred_region
      _
    $region5: #{tpu_custom_call.1} parent=1 // pred_fallthru
      _
    // Predicated region
    $region6: #{tpu_custom_call.1} parent=1 // pred_check
      _
    $region7: #{tpu_custom_call.1} parent=1 // pred_check_branch
      %16 = sbr.rel (0) target = $region9
    $region8: #{tpu_custom_call.1} parent=1 // pred_region
      _
    $region9: #{tpu_custom_call.1} parent=1 // pred_fallthru
      _
    // Predicated region
    $region10: #{tpu_custom_call.1} parent=1 // pred_check
      _
    $region11: #{tpu_custom_call.1} parent=1 // pred_check_branch
      %18 = sbr.rel (0) target = $region13
    $region12: #{tpu_custom_call.1} parent=1 // pred_region
      _
    $region13: #{tpu_custom_call.1} parent=1 // pred_fallthru
      _
    // Predicated region
    $region14: #{tpu_custom_call.1} parent=1 // pred_check
      _
    $region15: #{tpu_custom_call.1} parent=1 // pred_check_branch
      %20 = sbr.rel (0) target = $region17
    $region16: #{tpu_custom_call.1} parent=1 // pred_region
      _
    $region17: #{tpu_custom_call.1} parent=1 // pred_fallthru
      _
    // Predicated region
    $region18: #{tpu_custom_call.1} parent=1 // pred_check
      _
    $region19: #{tpu_custom_call.1} parent=1 // pred_check_branch
      %22 = sbr.rel (0) target = $region21
    $region20: #{tpu_custom_call.1} parent=1 // pred_region
      _
    $region21: #{tpu_custom_call.1} parent=1 // pred_fallthru
      _
    // Predicated region
    $region22: #{tpu_custom_call.1} parent=1 // pred_check
      _
    $region23: #{tpu_custom_call.1} parent=1 // pred_check_branch
      %24 = sbr.rel (0) target = $region25
    $region24: #{tpu_custom_call.1} parent=1 // pred_region
      _
    $region25: #{tpu_custom_call.1} parent=1 // pred_fallthru
      _
    // Predicated region
    $region26: #{tpu_custom_call.1} parent=1 // pred_check
      _
    $region27: #{tpu_custom_call.1} parent=1 // pred_check_branch
      %26 = sbr.rel (0) target = $region29
    $region28: #{tpu_custom_call.1} parent=1 // pred_region
      _
    $region29: #{tpu_custom_call.1} parent=1 // pred_fallthru
      _
    %v27 = vld [vmem:[%s0] sm:$0xff]
    %v28 = vld [vmem:[%s1] sm:$0xff]
    %v29 = vld [vmem:[%s2] sm:$0x1]
    %v31 = vlaneseq
    %v32 = vshrl.u32 %v31, 7
    %v33 = vsub.s32 0, %v32
    %v34 = vrot.slane %v29, %v33
    %vm36 = vcmask 64512
    %v38 = vsel %vm36, %v27, 0
    %40 = vmatprep.subr.mxu0 0.0
    %41 = vmatpush1.msra.mxu0 0.0
    %42 = vmatprep.subr.mxu0 0.0
    %43 = vmatpush1.msra.mxu0 0.0
    %44 = vmatprep.subr.mxu0 0.0
    %45 = vmatpush1.msra.mxu0 0.0
    %46 = vmatprep.subr.mxu0 0.0
    %47 = vmatpush1.msra.mxu0 0.0
    %48 = vmatprep.subr.mxu0 0.0
    %49 = vmatpush1.msra.mxu0 0.0
    %50 = vmatprep.subr.mxu0 0.0
    %51 = vmatpush1.msra.mxu0 0.0
    %52 = vmatprep.subr.mxu0 0.0
    %53 = vmatpush1.msra.mxu0 0.0
    %54 = vmatprep.subr.mxu0 0.0
    %55 = vmatpush1.msra.mxu0 0.0
    %56 = vmatprep.subr.mxu0 0.0
    %57 = vmatpush1.msra.mxu0 0.0
    %58 = vmatprep.subr.mxu0 0.0
    %59 = vmatpush1.msra.mxu0 0.0
    %60 = vmatprep.subr.mxu0 0.0
    %61 = vmatpush1.msra.mxu0 0.0
    %62 = vmatprep.subr.mxu0 0.0
    %63 = vmatpush1.msra.mxu0 0.0
    %64 = vmatprep.subr.mxu0 0.0
    %65 = vmatpush1.msra.mxu0 0.0
    %66 = vmatprep.subr.mxu0 0.0
    %67 = vmatpush1.msra.mxu0 0.0
    %68 = vmatprep.subr.mxu0 0.0
    %69 = vmatpush1.msra.mxu0 0.0
    %70 = vmatprep.subr.mxu0 0.0
    %71 = vmatpush1.msra.mxu0 %v28
    %72 = vmatprep.subr.mxu0 0.0
    %73 = vmatpush2.msra.mxu0 0.0
    %74 = vmatprep.subr.mxu0 0.0
    %75 = vmatpush2.msra.mxu0 0.0
    %76 = vmatprep.subr.mxu0 0.0
    %77 = vmatpush2.msra.mxu0 0.0
    %78 = vmatprep.subr.mxu0 0.0
    %79 = vmatpush2.msra.mxu0 0.0
    %80 = vmatprep.subr.mxu0 0.0
    %81 = vmatpush2.msra.mxu0 0.0
    %82 = vmatprep.subr.mxu0 0.0
    %83 = vmatpush2.msra.mxu0 0.0
    %84 = vmatprep.subr.mxu0 0.0
    %85 = vmatpush2.msra.mxu0 0.0
    %86 = vmatprep.subr.mxu0 0.0
    %87 = vmatpush2.msra.mxu0 0.0
    %88 = vmatprep.subr.mxu0 0.0
    %89 = vmatpush2.msra.mxu0 0.0
    %90 = vmatprep.subr.mxu0 0.0
    %91 = vmatpush2.msra.mxu0 0.0
    %92 = vmatprep.subr.mxu0 0.0
    %93 = vmatpush2.msra.mxu0 0.0
    %94 = vmatprep.subr.mxu0 0.0
    %95 = vmatpush2.msra.mxu0 0.0
    %96 = vmatprep.subr.mxu0 0.0
    %97 = vmatpush2.msra.mxu0 0.0
    %98 = vmatprep.subr.mxu0 0.0
    %99 = vmatpush2.msra.mxu0 0.0
    %100 = vmatprep.subr.mxu0 0.0
    %101 = vmatpush2.msra.mxu0 0.0
    %102 = vmatprep.subr.mxu0 0.0
    %103 = vmatpush2.msra.mxu0 0.0
    %104 = vmatprep.mubr.f32.mxu0 0.0
    %105 = vmatmul.mubr.f32.gmra.mxu0 %v38
    %v106 = vpop.f32.mrf.mxu0
    %v107 = vadd.f32 %v34, %v106
    %v108 = vpop.f32.mrf.mxu0
    %109 = vdwg.mxu0
    %v110 = vtanh.pop %v107
    %v111 = vld [vmem:[%s3] sm:$0xff]
    %v112 = vld [vmem:[%s3 + $0x8] sm:$0xff]
    %v113 = vld [vmem:[%s3 + $0x10] sm:$0xff]
    %v114 = vld [vmem:[%s3 + $0x18] sm:$0xff]
    %v115 = vld [vmem:[%s4] sm:$0x1]
    %v117 = vlaneseq
    %v118 = vshrl.u32 %v117, 7
    %v119 = vsub.s32 0, %v118
    %v120 = vrot.slane %v115, %v119
    %vm122 = vcmask 261120
    %v124 = vsel %vm122, %v110, 0
    %126 = vmatprep.subr.mxu0 0.0
    %127 = vmatpush1.msra.mxu0 0.0
    %128 = vmatprep.subr.mxu0 0.0
    %129 = vmatpush1.msra.mxu0 0.0
    %130 = vmatprep.subr.mxu0 0.0
    %131 = vmatpush1.msra.mxu0 0.0
    %132 = vmatprep.subr.mxu0 0.0
    %133 = vmatpush1.msra.mxu0 0.0
    %134 = vmatprep.subr.mxu0 0.0
    %135 = vmatpush1.msra.mxu0 0.0
    %136 = vmatprep.subr.mxu0 0.0
    %137 = vmatpush1.msra.mxu0 0.0
    %138 = vmatprep.subr.mxu0 0.0
    %139 = vmatpush1.msra.mxu0 0.0
    %140 = vmatprep.subr.mxu0 0.0
    %141 = vmatpush1.msra.mxu0 0.0
    %142 = vmatprep.subr.mxu0 0.0
    %143 = vmatpush1.msra.mxu0 0.0
    %144 = vmatprep.subr.mxu0 0.0
    %145 = vmatpush1.msra.mxu0 0.0
    %146 = vmatprep.subr.mxu0 0.0
    %147 = vmatpush1.msra.mxu0 0.0
    %148 = vmatprep.subr.mxu0 0.0
    %149 = vmatpush1.msra.mxu0 0.0
    %150 = vmatprep.subr.mxu0 0.0
    %151 = vmatpush1.msra.mxu0 %v114
    %152 = vmatprep.subr.mxu0 0.0
    %153 = vmatpush1.msra.mxu0 %v113
    %154 = vmatprep.subr.mxu0 0.0
    %155 = vmatpush1.msra.mxu0 %v112
    %156 = vmatprep.subr.mxu0 0.0
    %157 = vmatpush1.msra.mxu0 %v111
    %158 = vmatprep.subr.mxu0 0.0
    %159 = vmatpush2.msra.mxu0 0.0
    %160 = vmatprep.subr.mxu0 0.0
    %161 = vmatpush2.msra.mxu0 0.0
    %162 = vmatprep.subr.mxu0 0.0
    %163 = vmatpush2.msra.mxu0 0.0
    %164 = vmatprep.subr.mxu0 0.0
    %165 = vmatpush2.msra.mxu0 0.0
    %166 = vmatprep.subr.mxu0 0.0
    %167 = vmatpush2.msra.mxu0 0.0
    %168 = vmatprep.subr.mxu0 0.0
    %169 = vmatpush2.msra.mxu0 0.0
    %170 = vmatprep.subr.mxu0 0.0
    %171 = vmatpush2.msra.mxu0 0.0
    %172 = vmatprep.subr.mxu0 0.0
    %173 = vmatpush2.msra.mxu0 0.0
    %174 = vmatprep.subr.mxu0 0.0
    %175 = vmatpush2.msra.mxu0 0.0
    %176 = vmatprep.subr.mxu0 0.0
    %177 = vmatpush2.msra.mxu0 0.0
    %178 = vmatprep.subr.mxu0 0.0
    %179 = vmatpush2.msra.mxu0 0.0
    %180 = vmatprep.subr.mxu0 0.0
    %181 = vmatpush2.msra.mxu0 0.0
    %182 = vmatprep.subr.mxu0 0.0
    %183 = vmatpush2.msra.mxu0 0.0
    %184 = vmatprep.subr.mxu0 0.0
    %185 = vmatpush2.msra.mxu0 0.0
    %186 = vmatprep.subr.mxu0 0.0
    %187 = vmatpush2.msra.mxu0 0.0
    %188 = vmatprep.subr.mxu0 0.0
    %189 = vmatpush2.msra.mxu0 0.0
    %190 = vmatprep.mubr.f32.mxu0 0.0
    %191 = vmatmul.mubr.f32.gmra.mxu0 %v124
    %v192 = vpop.f32.mrf.mxu0
    %v193 = vadd.f32 %v120, %v192
    %v194 = vpop.f32.mrf.mxu0
    %195 = vdwg.mxu0
    %v196 = vtanh.pop %v193
    %v197 = vld [vmem:[%s5] sm:$0xff]
    %v198 = vld [vmem:[%s5 + $0x8] sm:$0xff]
    %v199 = vld [vmem:[%s5 + $0x10] sm:$0xff]
    %v200 = vld [vmem:[%s5 + $0x18] sm:$0xff]
    %v201 = vld [vmem:[%s5 + $0x20] sm:$0xff]
    %v202 = vld [vmem:[%s5 + $0x28] sm:$0xff]
    %v203 = vld [vmem:[%s5 + $0x30] sm:$0xff]
    %v204 = vld [vmem:[%s5 + $0x38] sm:$0xff]
    %v205 = vld [vmem:[%s6] sm:$0x1]
    %v207 = vlaneseq
    %v208 = vshrl.u32 %v207, 7
    %v209 = vsub.s32 0, %v208
    %v210 = vrot.slane %v205, %v209
    %vm212 = vcmask 523264
    %v214 = vsel %vm212, %v196, 0
    %216 = vmatprep.subr.mxu0 0.0
    %217 = vmatpush1.msra.mxu0 0.0
    %218 = vmatprep.subr.mxu0 0.0
    %219 = vmatpush1.msra.mxu0 0.0
    %220 = vmatprep.subr.mxu0 0.0
    %221 = vmatpush1.msra.mxu0 0.0
    %222 = vmatprep.subr.mxu0 0.0
    %223 = vmatpush1.msra.mxu0 0.0
    %224 = vmatprep.subr.mxu0 0.0
    %225 = vmatpush1.msra.mxu0 0.0
    %226 = vmatprep.subr.mxu0 0.0
    %227 = vmatpush1.msra.mxu0 0.0
    %228 = vmatprep.subr.mxu0 0.0
    %229 = vmatpush1.msra.mxu0 0.0
    %230 = vmatprep.subr.mxu0 0.0
    %231 = vmatpush1.msra.mxu0 0.0
    %232 = vmatprep.subr.mxu0 0.0
    %233 = vmatpush1.msra.mxu0 %v204
    %234 = vmatprep.subr.mxu0 0.0
    %235 = vmatpush1.msra.mxu0 %v203
    %236 = vmatprep.subr.mxu0 0.0
    %237 = vmatpush1.msra.mxu0 %v202
    %238 = vmatprep.subr.mxu0 0.0
    %239 = vmatpush1.msra.mxu0 %v201
    %240 = vmatprep.subr.mxu0 0.0
    %241 = vmatpush1.msra.mxu0 %v200
    %242 = vmatprep.subr.mxu0 0.0
    %243 = vmatpush1.msra.mxu0 %v199
    %244 = vmatprep.subr.mxu0 0.0
    %245 = vmatpush1.msra.mxu0 %v198
    %246 = vmatprep.subr.mxu0 0.0
    %247 = vmatpush1.msra.mxu0 %v197
    %248 = vmatprep.subr.mxu0 0.0
    %249 = vmatpush2.msra.mxu0 0.0
    %250 = vmatprep.subr.mxu0 0.0
    %251 = vmatpush2.msra.mxu0 0.0
    %252 = vmatprep.subr.mxu0 0.0
    %253 = vmatpush2.msra.mxu0 0.0
    %254 = vmatprep.subr.mxu0 0.0
    %255 = vmatpush2.msra.mxu0 0.0
    %256 = vmatprep.subr.mxu0 0.0
    %257 = vmatpush2.msra.mxu0 0.0
    %258 = vmatprep.subr.mxu0 0.0
    %259 = vmatpush2.msra.mxu0 0.0
    %260 = vmatprep.subr.mxu0 0.0
    %261 = vmatpush2.msra.mxu0 0.0
    %262 = vmatprep.subr.mxu0 0.0
    %263 = vmatpush2.msra.mxu0 0.0
    %264 = vmatprep.subr.mxu0 0.0
    %265 = vmatpush2.msra.mxu0 0.0
    %266 = vmatprep.subr.mxu0 0.0
    %267 = vmatpush2.msra.mxu0 0.0
    %268 = vmatprep.subr.mxu0 0.0
    %269 = vmatpush2.msra.mxu0 0.0
    %270 = vmatprep.subr.mxu0 0.0
    %271 = vmatpush2.msra.mxu0 0.0
    %272 = vmatprep.subr.mxu0 0.0
    %273 = vmatpush2.msra.mxu0 0.0
    %274 = vmatprep.subr.mxu0 0.0
    %275 = vmatpush2.msra.mxu0 0.0
    %276 = vmatprep.subr.mxu0 0.0
    %277 = vmatpush2.msra.mxu0 0.0
    %278 = vmatprep.subr.mxu0 0.0
    %279 = vmatpush2.msra.mxu0 0.0
    %280 = vmatprep.mubr.f32.mxu0 0.0
    %281 = vmatmul.mubr.f32.gmra.mxu0 %v214
    %v282 = vpop.f32.mrf.mxu0
    %v283 = vadd.f32 %v210, %v282
    %v284 = vpop.f32.mrf.mxu0
    %285 = vdwg.mxu0
    %v286 = vlaneseq
    %v287 = vand.u32 %v286, 127
    %vm288 = vcmp.lt.s32.totalorder %v287, 4
    %v289 = vsel %vm288, %v283, -inf
    %v290 = vsel %vm36, %v289, -inf
    %291 = vmax.xlane.f32.xlu0 %v290
    %v292 = vpop.xlane.xlu0 %291
    %v293 = vsub.f32 %v289, %v292
    %v294 = vmul.f32 %v293, 1.442695
    %v295 = vpow.pop %v294
    %v296 = vsel %vm36, %v295, 0.0
    %297 = vadd.xlane.f32.xlu0 %v296
    %v298 = vpop.xlane.xlu0 %297
    %v299 = vrcp.pop %v298
    %v300 = vmul.f32 %v298, %v299
    %v301 = vsub.f32 2.0, %v300
    %v302 = vmul.f32 %v299, %v301
    %v303 = vmul.f32 %v295, %v302
    %v304 = vsel %vm288, %v303, %v283
    %305 = vst.msk [vmem:[#allocation2] sm:$0xff] %vm36, %v304
    // Predicated region
    $region30: #{tpu_custom_call.1} parent=1 // pred_check
      _
    $region31: #{tpu_custom_call.1} parent=1 // pred_check_branch
      %307 = sbr.rel (0) target = $region33
    $region32: #{tpu_custom_call.1} parent=1 // pred_region
      %s309 = ssub.s32 128, 128
      %310 = vsyncadd [#allocation3], %s309
      %s312 = sshll.u32 [#allocation2], 4
      %s313 = int_to_ptr.vmem [resolvable:$true] %s312
      %315 = dma.vmem_to_hbm [thread:$0]  %s313, 128, %s7, [#allocation3]
    $region33: #{tpu_custom_call.1} parent=1 // pred_fallthru
      _
    // Predicated region
    $region34: #{tpu_custom_call.1} parent=1 // pred_check
      _
    $region35: #{tpu_custom_call.1} parent=1 // pred_check_branch
      %317 = sbr.rel (0) target = $region37
    $region36: #{tpu_custom_call.1} parent=1 // pred_region
      %318 = dma.done [#allocation3], 128
    $region37: #{tpu_custom_call.1} parent=1 // pred_fallthru
      _
    %319 = vsyncpa [#allocation3], 1

</llo_original>
